<compile_context>
chip_gen: v7x
topology: tpu7x:2x2x1
jax: 0.10.0
libtpu: 0.0.40
codegen_flags: <defaults>
</compile_context>

<pallas_src>
import jax
import jax.numpy as jnp
from jax.experimental import pallas as pl
from jax.experimental.pallas import tpu as pltpu

LANE = 128       # vreg lane width; hidden/output feature dims padded to this
SUBLANE = 8
SEG_ALIGN = 16   # bf16 packs 16 rows per sublane tile -> align slab segments


def _round_up(x, m):
    return (x + m - 1) // m * m


def _cdiv(a, b):
    return (a + b - 1) // b


def _layout(state_size):
    """Row offsets of each parameter inside the packed (rows, 128) bf16 slab.
    Every segment starts on a 16-row (bf16 sublane-tile) boundary."""
    s_rows = _round_up(state_size, SEG_ALIGN)
    off_w1 = 0
    off_b1 = off_w1 + s_rows
    off_w2 = off_b1 + SEG_ALIGN
    off_b2 = off_w2 + LANE
    off_w3 = off_b2 + SEG_ALIGN
    off_b3 = off_w3 + LANE
    total = off_b3 + SEG_ALIGN
    return {"w1": off_w1, "b1": off_b1, "w2": off_w2, "b2": off_b2,
            "w3": off_w3, "b3": off_b3, "total": total}


def pack_params(params):
    """Pack (w1,b1,w2,b2,w3,b3) into one zero-padded (rows, 128) bf16 slab."""
    w1, b1, w2, b2, w3, b3 = params
    S, H1 = w1.shape
    H2 = w2.shape[1]
    A = w3.shape[1]
    assert H1 <= LANE and H2 <= LANE and A <= LANE, "feature dims must be <= 128"
    lay = _layout(S)
    slab = jnp.zeros((lay["total"], LANE), jnp.bfloat16)
    slab = slab.at[lay["w1"]:lay["w1"] + S, :H1].set(w1.astype(jnp.bfloat16))
    slab = slab.at[lay["b1"]:lay["b1"] + 1, :H1].set(b1.astype(jnp.bfloat16))
    slab = slab.at[lay["w2"]:lay["w2"] + H1, :H2].set(w2.astype(jnp.bfloat16))
    slab = slab.at[lay["b2"]:lay["b2"] + 1, :H2].set(b2.astype(jnp.bfloat16))
    slab = slab.at[lay["w3"]:lay["w3"] + H2, :A].set(w3.astype(jnp.bfloat16))
    slab = slab.at[lay["b3"]:lay["b3"] + 1, :A].set(b3.astype(jnp.bfloat16))
    return slab


def _make_kernel(state_size, a_pad, lay):
    S = state_size
    ow1, ob1 = lay["w1"], lay["b1"]
    ow2, ob2 = lay["w2"], lay["b2"]
    ow3, ob3 = lay["w3"], lay["b3"]

    def kernel(x_ref, p_ref, out_ref):
        x = x_ref[...]                                        # (TB, S) bf16
        w1 = p_ref[ow1:ow1 + S, :]                            # (S, 128) bf16
        b1 = p_ref[ob1:ob1 + 1, :].astype(jnp.float32)        # (1, 128) f32
        w2 = p_ref[ow2:ow2 + LANE, :]                         # (128, 128)
        b2 = p_ref[ob2:ob2 + 1, :].astype(jnp.float32)
        w3 = p_ref[ow3:ow3 + LANE, :]                         # (128, 128)
        b3 = p_ref[ob3:ob3 + 1, :].astype(jnp.float32)

        # fc1 + ReLU: bf16 operands, f32 accumulation. Padded hidden lanes
        # stay exactly 0 because W/b pads are 0.
        h1 = jnp.maximum(
            jnp.dot(x, w1, preferred_element_type=jnp.float32) + b1, 0.0)
        # fc2 + ReLU
        h2 = jnp.maximum(
            jnp.dot(h1.astype(jnp.bfloat16), w2,
                    preferred_element_type=jnp.float32) + b2, 0.0)
        # fc3 (no activation)
        q = jnp.dot(h2.astype(jnp.bfloat16), w3,
                    preferred_element_type=jnp.float32) + b3   # (TB, 128) f32

        # Transpose so the store is lane-dense over batch and only a_pad (=8)
        # sublanes get written back (vs 128 padded lanes previously).
        qt = q.T                                               # (128, TB)
        out_ref[...] = qt[:a_pad, :].astype(out_ref.dtype)     # (a_pad, TB)

    return kernel


def _choose_batch_tiling(batch, block_b):
    """Pick (tile, padded_batch, n_steps).

    - cap per-step tile at block_b (amortizes ~0.35us/step overhead),
    - force >= 2 steps once the batch is big enough so v7x's two TensorCores
      both get work on the 'parallel' axis,
    - keep the tile a multiple of 128 when there is more than one tile so the
      transposed output store stays lane-dense.
    """
    n_steps = max(1, _cdiv(batch, block_b))
    if n_steps == 1 and batch >= 2 * LANE:
        n_steps = 2
    if n_steps > 1:
        tb = _round_up(_cdiv(batch, n_steps), LANE)
    else:
        tb = _round_up(batch, SUBLANE)
    return tb, tb * n_steps, n_steps


def qnetwork_forward(state, params, *, block_b=2048):
    """state: [B, state_size] float32. Returns [B, action_size] float32."""
    w1, b1, w2, b2, w3, b3 = params
    B, S = state.shape
    A = w3.shape[1]
    a_pad = _round_up(A, SUBLANE)
    lay = _layout(S)
    slab = pack_params(params)

    TB, B_pad, n_steps = _choose_batch_tiling(B, block_b)
    x = state.astype(jnp.bfloat16)
    if B_pad != B:
        x = jnp.pad(x, ((0, B_pad - B), (0, 0)))

    out_t = pl.pallas_call(
        _make_kernel(S, a_pad, lay),
        out_shape=jax.ShapeDtypeStruct((a_pad, B_pad), jnp.float32),
        grid=(n_steps,),
        in_specs=[
            # batch tile of activations, pipelined over the grid
            pl.BlockSpec((TB, S), lambda i: (i, 0)),
            # single packed parameter slab: constant index_map, fetched once,
            # single-buffered (no point double-buffering an invariant block)
            pl.BlockSpec((lay["total"], LANE), lambda i: (0, 0),
                         pipeline_mode=pl.Buffered(1)),
        ],
        # transposed output: (a_pad, TB) blocks tiled along the lane axis
        out_specs=pl.BlockSpec((a_pad, TB), lambda i: (0, i)),
        compiler_params=pltpu.CompilerParams(
            dimension_semantics=("parallel",)),
    )(x, slab)

    return out_t[:A, :B].T


def init_params(key, state_size, action_size, fc1_units=64, fc2_units=64):
    """Deterministic init mimicking PyTorch's default Linear init
    (uniform(-1/sqrt(fan_in), 1/sqrt(fan_in)))."""
    def linear(k, fan_in, fan_out):
        kw, kb = jax.random.split(k)
        bound = 1.0 / jnp.sqrt(jnp.float32(fan_in))
        w = jax.random.uniform(kw, (fan_in, fan_out), jnp.float32, -bound, bound)
        b = jax.random.uniform(kb, (1, fan_out), jnp.float32, -bound, bound)
        return w, b

    k1, k2, k3 = jax.random.split(key, 3)
    w1, b1 = linear(k1, state_size, fc1_units)
    w2, b2 = linear(k2, fc1_units, fc2_units)
    w3, b3 = linear(k3, fc2_units, action_size)
    return (w1, b1, w2, b2, w3, b3)


def reference_forward(state, params):
    w1, b1, w2, b2, w3, b3 = params
    h1 = jnp.maximum(state @ w1 + b1, 0.0)
    h2 = jnp.maximum(h1 @ w2 + b2, 0.0)
    return h2 @ w3 + b3


if __name__ == "__main__":
    state_size = 16
    action_size = 4

    key = jax.random.PRNGKey(0)
    k_params, k_state1, k_state2 = jax.random.split(key, 3)
    params = init_params(k_params, state_size, action_size)

    # Tolerance is loosened vs the old f32 path because MXU operands are bf16
    # (accumulation stays f32).
    ATOL = RTOL = 5e-2

    # Case 1: tiny batch (single grid step).
    batch = 8
    state = jax.random.normal(k_state1, (batch, state_size), jnp.float32)
    out = jax.block_until_ready(qnetwork_forward(state, params))
    ref = reference_forward(state, params)
    assert out.shape == (batch, action_size)
    assert jnp.allclose(out, ref, atol=ATOL, rtol=RTOL), "mismatch vs reference (B=8)"

    # Case 2: batch large enough to use >=2 grid steps (lane-dense tiled path,
    # exercises the v7x two-TensorCore split and batch padding).
    batch = 300
    state = jax.random.normal(k_state2, (batch, state_size), jnp.float32)
    out = jax.block_until_ready(qnetwork_forward(state, params))
    ref = reference_forward(state, params)
    assert out.shape == (batch, action_size)
    assert jnp.allclose(out, ref, atol=ATOL, rtol=RTOL), "mismatch vs reference (B=300)"

    print("KERNEL_OK")
</pallas_src>

<mosaic_0001>
module attributes {stable_mosaic.version = 11 : i64} {
  func.func @kernel(%arg0: i32, %arg1: memref<8x16xbf16, #tpu.memory_space<vmem>>, %arg2: memref<320x128xbf16, #tpu.memory_space<vmem>>, %arg3: memref<8x8xf32, #tpu.memory_space<vmem>>) attributes {dimension_semantics = [#tpu.dimension_semantics<parallel>], iteration_bounds = array<i64: 1>, scalar_prefetch = 0 : i64, scratch_operands = 0 : i64, tpu.core_type = #tpu.core_type<tc>, window_params = [{transform_indices = @transform_0, window_bounds = array<i64: 8, 16>}, {pipeline_mode = #tpu.pipeline_mode<synchronous>, transform_indices = @transform_1, window_bounds = array<i64: 320, 128>}, {transform_indices = @transform_2, window_bounds = array<i64: 8, 8>}]} {
    %c0 = arith.constant 0 : index
    %c0_0 = arith.constant 0 : index
    %0 = vector.load %arg1[%c0, %c0_0] : memref<8x16xbf16, #tpu.memory_space<vmem>>, vector<8x16xbf16>
    %c0_1 = arith.constant 0 : index
    %c0_2 = arith.constant 0 : index
    %1 = vector.load %arg2[%c0_1, %c0_2] : memref<320x128xbf16, #tpu.memory_space<vmem>>, vector<16x128xbf16>
    %c16 = arith.constant 16 : index
    %c0_3 = arith.constant 0 : index
    %2 = vector.load %arg2[%c16, %c0_3] : memref<320x128xbf16, #tpu.memory_space<vmem>>, vector<1x128xbf16>
    %3 = arith.extf %2 : vector<1x128xbf16> to vector<1x128xf32>
    %c32 = arith.constant 32 : index
    %c0_4 = arith.constant 0 : index
    %4 = vector.load %arg2[%c32, %c0_4] : memref<320x128xbf16, #tpu.memory_space<vmem>>, vector<128x128xbf16>
    %c160 = arith.constant 160 : index
    %c0_5 = arith.constant 0 : index
    %5 = vector.load %arg2[%c160, %c0_5] : memref<320x128xbf16, #tpu.memory_space<vmem>>, vector<1x128xbf16>
    %6 = arith.extf %5 : vector<1x128xbf16> to vector<1x128xf32>
    %c176 = arith.constant 176 : index
    %c0_6 = arith.constant 0 : index
    %7 = vector.load %arg2[%c176, %c0_6] : memref<320x128xbf16, #tpu.memory_space<vmem>>, vector<128x128xbf16>
    %c304 = arith.constant 304 : index
    %c0_7 = arith.constant 0 : index
    %8 = vector.load %arg2[%c304, %c0_7] : memref<320x128xbf16, #tpu.memory_space<vmem>>, vector<1x128xbf16>
    %9 = arith.extf %8 : vector<1x128xbf16> to vector<1x128xf32>
    %cst = arith.constant dense<0.000000e+00> : vector<8x128xf32>
    %10 = tpu.matmul %0, %1, %cst {dimension_numbers = #tpu.dot_dimension_numbers<[1], [0], [0], [1], [0, 0, 1, 1], [], []>} : vector<8x16xbf16>, vector<16x128xbf16>, vector<8x128xf32> -> vector<8x128xf32>
    %11 = vector.broadcast %3 : vector<1x128xf32> to vector<8x128xf32>
    %12 = arith.addf %10, %11 : vector<8x128xf32>
    %cst_8 = arith.constant 0.000000e+00 : f32
    %13 = vector.broadcast %cst_8 : f32 to vector<8x128xf32>
    %14 = arith.maximumf %12, %13 : vector<8x128xf32>
    %15 = arith.truncf %14 : vector<8x128xf32> to vector<8x128xbf16>
    %cst_9 = arith.constant dense<0.000000e+00> : vector<8x128xf32>
    %16 = tpu.matmul %15, %4, %cst_9 {dimension_numbers = #tpu.dot_dimension_numbers<[1], [0], [0], [1], [0, 0, 1, 1], [], []>} : vector<8x128xbf16>, vector<128x128xbf16>, vector<8x128xf32> -> vector<8x128xf32>
    %17 = vector.broadcast %6 : vector<1x128xf32> to vector<8x128xf32>
    %18 = arith.addf %16, %17 : vector<8x128xf32>
    %cst_10 = arith.constant 0.000000e+00 : f32
    %19 = vector.broadcast %cst_10 : f32 to vector<8x128xf32>
    %20 = arith.maximumf %18, %19 : vector<8x128xf32>
    %21 = arith.truncf %20 : vector<8x128xf32> to vector<8x128xbf16>
    %cst_11 = arith.constant dense<0.000000e+00> : vector<8x128xf32>
    %22 = tpu.matmul %21, %7, %cst_11 {dimension_numbers = #tpu.dot_dimension_numbers<[1], [0], [0], [1], [0, 0, 1, 1], [], []>} : vector<8x128xbf16>, vector<128x128xbf16>, vector<8x128xf32> -> vector<8x128xf32>
    %23 = vector.broadcast %9 : vector<1x128xf32> to vector<8x128xf32>
    %24 = arith.addf %22, %23 : vector<8x128xf32>
    %25 = tpu.transpose %24, [1, 0] : vector<8x128xf32> -> vector<128x8xf32>
    %26 = vector.extract_strided_slice %25 {offsets = [0, 0], sizes = [8, 8], strides = [1, 1]} : vector<128x8xf32> to vector<8x8xf32>
    %c0_12 = arith.constant 0 : index
    %c0_13 = arith.constant 0 : index
    %27 = vector.load %arg3[%c0_12, %c0_13] : memref<8x8xf32, #tpu.memory_space<vmem>>, vector<8x8xf32>
    tpu.vector_store %arg3[%c0_12, %c0_13], %26 {strides = array<i32>} : memref<8x8xf32, #tpu.memory_space<vmem>>, vector<8x8xf32>,
    return
  }
  func.func @transform_0(%arg0: i32) -> (i32, i32) {
    %c0_i32 = arith.constant 0 : i32
    %c0_i32_0 = arith.constant 0 : i32
    return %arg0, %c0_i32 : i32, i32
  }
  func.func @transform_1(%arg0: i32) -> (i32, i32) {
    %c0_i32 = arith.constant 0 : i32
    %c0_i32_0 = arith.constant 0 : i32
    %c0_i32_1 = arith.constant 0 : i32
    return %c0_i32, %c0_i32_0 : i32, i32
  }
  func.func @transform_2(%arg0: i32) -> (i32, i32) {
    %c0_i32 = arith.constant 0 : i32
    %c0_i32_0 = arith.constant 0 : i32
    return %c0_i32, %arg0 : i32, i32
  }
}

</mosaic_0001>

<llo_original>
// kernel: tpu_custom_call.1
$region0: #{tpu_custom_call.1}
  #allocation0 [shape = 'u32[]', space=smem, size = 0x4, offset = 0x4, fixed_abs, tag = 'smem constant byte address 0x4 - core index']
  #allocation1 [shape = 'u32[144,128]{1,0:T(1,128)}', space=vmem, size = 0x12000, scoped, tag = 'internal scratch']
  %s0 = inlined_call_operand.hbm [shape: bf16[8,16], index: 0, kind: input, shape index: {}]
  %s1 = inlined_call_operand.hbm [shape: bf16[320,128], index: 1, kind: input, shape index: {}]
  %s2 = inlined_call_operand.hbm [shape: f32[8,8], index: 2, kind: output, shape index: {}]
  %s3 = sld [smem:[#allocation0]]
  $region26: #{tpu_custom_call.1} parent=0
    _
  %s5 = ssub.s32 1, %s3
  %s6 = scalar_select 0, %s5, %s3
  $region1: #{tpu_custom_call.1} parent=0
    #allocation2 [shape = 'u8[2048]{0}', space=vmem, size = 0x800, scoped, tag = 'input window, operand 0, single buffered']
    #allocation3 [shape = 's32[1]{0}', space=sflag, size = 0x4, scoped, tag = 'scoped memory for tpu_custom_call.1']
    #allocation4 [shape = 's32[1]{0}', space=sflag, size = 0x4, scoped, tag = 'scoped memory for tpu_custom_call.1']
    #allocation5 [shape = 'u8[81920]{0}', space=vmem, size = 0x14000, scoped, tag = 'input window, operand 1, single buffered']
    #allocation6 [shape = 's32[1]{0}', space=sflag, size = 0x4, scoped, tag = 'scoped memory for tpu_custom_call.1']
    #allocation7 [shape = 'u8[4096]{0}', space=vmem, size = 0x1000, scoped, tag = 'output window, operand 0, single buffered']
    %7 = vsyncpa [#allocation3], 0
    %8 = vsyncpa [#allocation6], 0
    %9 = vsyncpa [#allocation4], 0
    // Predicated region
    $region2: #{tpu_custom_call.1} parent=1 // pred_check
      _
    $region3: #{tpu_custom_call.1} parent=1 // pred_check_branch
      %11 = sbr.rel (0) target = $region5
    $region4: #{tpu_custom_call.1} parent=1 // pred_region
      %s13 = ssub.s32 64, 64
      %14 = vsyncadd [#allocation3], %s13
      %s16 = sshll.u32 [#allocation2], 4
      %s17 = int_to_ptr.vmem [resolvable:$true] %s16
      %19 = dma.hbm_to_vmem [thread:$0]  %s0, 64, %s17, [#allocation3]
    $region5: #{tpu_custom_call.1} parent=1 // pred_fallthru
      _
    // Predicated region
    $region6: #{tpu_custom_call.1} parent=1 // pred_check
      _
    $region7: #{tpu_custom_call.1} parent=1 // pred_check_branch
      %21 = sbr.rel (0) target = $region9
    $region8: #{tpu_custom_call.1} parent=1 // pred_region
      %s23 = ssub.s32 2560, 2560
      %24 = vsyncadd [#allocation6], %s23
      %s25 = sshll.u32 [#allocation5], 4
      %s26 = int_to_ptr.vmem [resolvable:$true] %s25
      %31 = dma.hbm_to_vmem [thread:$0]  %s1, 2560, %s26, [#allocation6], 64, 64, 4
    $region9: #{tpu_custom_call.1} parent=1 // pred_fallthru
      _
    // Predicated region
    $region10: #{tpu_custom_call.1} parent=1 // pred_check
      _
    $region11: #{tpu_custom_call.1} parent=1 // pred_check_branch
      %33 = sbr.rel (0) target = $region13
    $region12: #{tpu_custom_call.1} parent=1 // pred_region
      %34 = dma.done [#allocation3], 64
    $region13: #{tpu_custom_call.1} parent=1 // pred_fallthru
      _
    // Predicated region
    $region14: #{tpu_custom_call.1} parent=1 // pred_check
      _
    $region15: #{tpu_custom_call.1} parent=1 // pred_check_branch
      %36 = sbr.rel (0) target = $region17
    $region16: #{tpu_custom_call.1} parent=1 // pred_region
      %37 = dma.done [#allocation6], 2560
    $region17: #{tpu_custom_call.1} parent=1 // pred_fallthru
      _
    %v39 = vld [vmem:[#allocation2] sm:$0xf]
    %v40 = vld [vmem:[#allocation5] sm:$0xf]
    %v41 = vld [vmem:[#allocation5 + $0x4] sm:$0xf]
    %v42 = vld [vmem:[#allocation5 + $0x8] sm:$0x1]
    %v43 = vunpack.c.l.bf16 %v42
    %v44 = vld [vmem:[#allocation5 + $0x10] sm:$0xf]
    %v45 = vld [vmem:[#allocation5 + $0x14] sm:$0xf]
    %v46 = vld [vmem:[#allocation5 + $0x18] sm:$0xf]
    %v47 = vld [vmem:[#allocation5 + $0x1c] sm:$0xf]
    %v48 = vld [vmem:[#allocation5 + $0x20] sm:$0xf]
    %v49 = vld [vmem:[#allocation5 + $0x24] sm:$0xf]
    %v50 = vld [vmem:[#allocation5 + $0x28] sm:$0xf]
    %v51 = vld [vmem:[#allocation5 + $0x2c] sm:$0xf]
    %v52 = vld [vmem:[#allocation5 + $0x30] sm:$0xf]
    %v53 = vld [vmem:[#allocation5 + $0x34] sm:$0xf]
    %v54 = vld [vmem:[#allocation5 + $0x38] sm:$0xf]
    %v55 = vld [vmem:[#allocation5 + $0x3c] sm:$0xf]
    %v56 = vld [vmem:[#allocation5 + $0x40] sm:$0xf]
    %v57 = vld [vmem:[#allocation5 + $0x44] sm:$0xf]
    %v58 = vld [vmem:[#allocation5 + $0x48] sm:$0xf]
    %v59 = vld [vmem:[#allocation5 + $0x4c] sm:$0xf]
    %v60 = vld [vmem:[#allocation5 + $0x50] sm:$0x1]
    %v61 = vunpack.c.l.bf16 %v60
    %v62 = vld [vmem:[#allocation5 + $0x58] sm:$0xf]
    %v63 = vld [vmem:[#allocation5 + $0x5c] sm:$0xf]
    %v64 = vld [vmem:[#allocation5 + $0x60] sm:$0xf]
    %v65 = vld [vmem:[#allocation5 + $0x64] sm:$0xf]
    %v66 = vld [vmem:[#allocation5 + $0x68] sm:$0xf]
    %v67 = vld [vmem:[#allocation5 + $0x6c] sm:$0xf]
    %v68 = vld [vmem:[#allocation5 + $0x70] sm:$0xf]
    %v69 = vld [vmem:[#allocation5 + $0x74] sm:$0xf]
    %v70 = vld [vmem:[#allocation5 + $0x78] sm:$0xf]
    %v71 = vld [vmem:[#allocation5 + $0x7c] sm:$0xf]
    %v72 = vld [vmem:[#allocation5 + $0x80] sm:$0xf]
    %v73 = vld [vmem:[#allocation5 + $0x84] sm:$0xf]
    %v74 = vld [vmem:[#allocation5 + $0x88] sm:$0xf]
    %v75 = vld [vmem:[#allocation5 + $0x8c] sm:$0xf]
    %v76 = vld [vmem:[#allocation5 + $0x90] sm:$0xf]
    %v77 = vld [vmem:[#allocation5 + $0x94] sm:$0xf]
    %v78 = vld [vmem:[#allocation5 + $0x98] sm:$0x1]
    %v79 = vunpack.c.l.bf16 %v78
    %v80 = vlaneseq
    %v81 = vshrl.u32 %v80, 7
    %v82 = vsub.s32 0, %v81
    %v83 = vrot.slane %v43, %v82
    %v86 = vunpack.c.l.b16 %v40
    %v87 = vunpack.c.l.b16 %v41
    %v88 = vpack.c.b16 %v87, %v86
    %vm90 = vcmask 130048
    %v92 = vsel %vm90, %v39, 0
    %94 = vmatprep.subr.bf16.mxu0 0
    %95 = vmatpush1.bf16.msra.mxu0 %v88
    %96 = vmatprep.subr.bf16.mxu0 0
    %97 = vmatpush1.bf16.msra.mxu0 0
    %98 = vmatprep.subr.bf16.mxu0 0
    %99 = vmatpush1.bf16.msra.mxu0 0
    %100 = vmatprep.subr.bf16.mxu0 0
    %101 = vmatpush1.bf16.msra.mxu0 0
    %102 = vmatprep.subr.bf16.mxu0 0
    %103 = vmatpush1.bf16.msra.mxu0 0
    %104 = vmatprep.subr.bf16.mxu0 0
    %105 = vmatpush1.bf16.msra.mxu0 0
    %106 = vmatprep.subr.bf16.mxu0 0
    %107 = vmatpush1.bf16.msra.mxu0 0
    %108 = vmatprep.subr.bf16.mxu0 0
    %109 = vmatpush1.bf16.msra.mxu0 0
    %110 = vmatprep.subr.bf16.mxu0 0
    %111 = vmatpush1.bf16.msra.mxu0 0
    %112 = vmatprep.subr.bf16.mxu0 0
    %113 = vmatpush1.bf16.msra.mxu0 0
    %114 = vmatprep.subr.bf16.mxu0 0
    %115 = vmatpush1.bf16.msra.mxu0 0
    %116 = vmatprep.subr.bf16.mxu0 0
    %117 = vmatpush1.bf16.msra.mxu0 0
    %118 = vmatprep.subr.bf16.mxu0 0
    %119 = vmatpush1.bf16.msra.mxu0 0
    %120 = vmatprep.subr.bf16.mxu0 0
    %121 = vmatpush1.bf16.msra.mxu0 0
    %122 = vmatprep.subr.bf16.mxu0 0
    %123 = vmatpush1.bf16.msra.mxu0 0
    %124 = vmatprep.subr.bf16.mxu0 0
    %125 = vmatpush1.bf16.msra.mxu0 0
    %126 = vmatprep.mubr.bf16.mxu0 0
    %127 = vmatmul.mubr.bf16.gmra.mrb[0].mxu0 %v92
    %v128 = vpop.f32.mrb[0].mxu0
    %v129 = vadd.f32 %v83, %v128
    %v130 = vpop.f32.mrb[0].mxu0
    %v131 = vpop.f32.mrb[0].mxu0
    %v132 = vpop.f32.mrb[0].mxu0
    %133 = vdwg.mxu0
    %v134 = vmax.f32 %v129, 0.0
    %v135 = vpack.c.bf16 %v134, %v134
    %v136 = vlaneseq
    %v137 = vshrl.u32 %v136, 7
    %v138 = vsub.s32 0, %v137
    %v139 = vrot.slane %v61, %v138
    %v156 = vunpack.c.l.b16 %v44
    %v157 = vunpack.c.l.b16 %v45
    %v158 = vunpack.c.l.b16 %v46
    %v159 = vunpack.c.l.b16 %v47
    %v160 = vunpack.c.l.b16 %v48
    %v161 = vunpack.c.l.b16 %v49
    %v162 = vunpack.c.l.b16 %v50
    %v163 = vunpack.c.l.b16 %v51
    %v164 = vunpack.c.l.b16 %v52
    %v165 = vunpack.c.l.b16 %v53
    %v166 = vunpack.c.l.b16 %v54
    %v167 = vunpack.c.l.b16 %v55
    %v168 = vunpack.c.l.b16 %v56
    %v169 = vunpack.c.l.b16 %v57
    %v170 = vunpack.c.l.b16 %v58
    %v171 = vunpack.c.l.b16 %v59
    %v172 = vpack.c.b16 %v157, %v156
    %v173 = vpack.c.b16 %v159, %v158
    %v174 = vpack.c.b16 %v161, %v160
    %v175 = vpack.c.b16 %v163, %v162
    %v176 = vpack.c.b16 %v165, %v164
    %v177 = vpack.c.b16 %v167, %v166
    %v178 = vpack.c.b16 %v169, %v168
    %v179 = vpack.c.b16 %v171, %v170
    %188 = vmatprep.subr.bf16.mxu0 0
    %189 = vmatpush1.bf16.msra.mxu0 %v172
    %190 = vmatprep.subr.bf16.mxu0 0
    %191 = vmatpush1.bf16.msra.mxu0 %v173
    %192 = vmatprep.subr.bf16.mxu0 0
    %193 = vmatpush1.bf16.msra.mxu0 %v174
    %194 = vmatprep.subr.bf16.mxu0 0
    %195 = vmatpush1.bf16.msra.mxu0 %v175
    %196 = vmatprep.subr.bf16.mxu0 0
    %197 = vmatpush1.bf16.msra.mxu0 %v176
    %198 = vmatprep.subr.bf16.mxu0 0
    %199 = vmatpush1.bf16.msra.mxu0 %v177
    %200 = vmatprep.subr.bf16.mxu0 0
    %201 = vmatpush1.bf16.msra.mxu0 %v178
    %202 = vmatprep.subr.bf16.mxu0 0
    %203 = vmatpush1.bf16.msra.mxu0 %v179
    %204 = vmatprep.subr.bf16.mxu0 0
    %205 = vmatpush1.bf16.msra.mxu0 0
    %206 = vmatprep.subr.bf16.mxu0 0
    %207 = vmatpush1.bf16.msra.mxu0 0
    %208 = vmatprep.subr.bf16.mxu0 0
    %209 = vmatpush1.bf16.msra.mxu0 0
    %210 = vmatprep.subr.bf16.mxu0 0
    %211 = vmatpush1.bf16.msra.mxu0 0
    %212 = vmatprep.subr.bf16.mxu0 0
    %213 = vmatpush1.bf16.msra.mxu0 0
    %214 = vmatprep.subr.bf16.mxu0 0
    %215 = vmatpush1.bf16.msra.mxu0 0
    %216 = vmatprep.subr.bf16.mxu0 0
    %217 = vmatpush1.bf16.msra.mxu0 0
    %218 = vmatprep.subr.bf16.mxu0 0
    %219 = vmatpush1.bf16.msra.mxu0 0
    %220 = vmatprep.mubr.bf16.mxu0 0
    %221 = vmatmul.mubr.bf16.gmra.mrb[0].mxu0 %v135
    %v222 = vpop.f32.mrb[0].mxu0
    %v223 = vadd.f32 %v139, %v222
    %v224 = vpop.f32.mrb[0].mxu0
    %v225 = vpop.f32.mrb[0].mxu0
    %v226 = vpop.f32.mrb[0].mxu0
    %227 = vdwg.mxu0
    %v228 = vmax.f32 %v223, 0.0
    %v229 = vpack.c.bf16 %v228, %v228
    %v230 = vlaneseq
    %v231 = vshrl.u32 %v230, 7
    %v232 = vsub.s32 0, %v231
    %v233 = vrot.slane %v79, %v232
    %v250 = vunpack.c.l.b16 %v62
    %v251 = vunpack.c.l.b16 %v63
    %v252 = vunpack.c.l.b16 %v64
    %v253 = vunpack.c.l.b16 %v65
    %v254 = vunpack.c.l.b16 %v66
    %v255 = vunpack.c.l.b16 %v67
    %v256 = vunpack.c.l.b16 %v68
    %v257 = vunpack.c.l.b16 %v69
    %v258 = vunpack.c.l.b16 %v70
    %v259 = vunpack.c.l.b16 %v71
    %v260 = vunpack.c.l.b16 %v72
    %v261 = vunpack.c.l.b16 %v73
    %v262 = vunpack.c.l.b16 %v74
    %v263 = vunpack.c.l.b16 %v75
    %v264 = vunpack.c.l.b16 %v76
    %v265 = vunpack.c.l.b16 %v77
    %v266 = vpack.c.b16 %v251, %v250
    %v267 = vpack.c.b16 %v253, %v252
    %v268 = vpack.c.b16 %v255, %v254
    %v269 = vpack.c.b16 %v257, %v256
    %v270 = vpack.c.b16 %v259, %v258
    %v271 = vpack.c.b16 %v261, %v260
    %v272 = vpack.c.b16 %v263, %v262
    %v273 = vpack.c.b16 %v265, %v264
    %282 = vmatprep.subr.bf16.mxu0 0
    %283 = vmatpush1.bf16.msra.mxu0 %v266
    %284 = vmatprep.subr.bf16.mxu0 0
    %285 = vmatpush1.bf16.msra.mxu0 %v267
    %286 = vmatprep.subr.bf16.mxu0 0
    %287 = vmatpush1.bf16.msra.mxu0 %v268
    %288 = vmatprep.subr.bf16.mxu0 0
    %289 = vmatpush1.bf16.msra.mxu0 %v269
    %290 = vmatprep.subr.bf16.mxu0 0
    %291 = vmatpush1.bf16.msra.mxu0 %v270
    %292 = vmatprep.subr.bf16.mxu0 0
    %293 = vmatpush1.bf16.msra.mxu0 %v271
    %294 = vmatprep.subr.bf16.mxu0 0
    %295 = vmatpush1.bf16.msra.mxu0 %v272
    %296 = vmatprep.subr.bf16.mxu0 0
    %297 = vmatpush1.bf16.msra.mxu0 %v273
    %298 = vmatprep.subr.bf16.mxu0 0
    %299 = vmatpush1.bf16.msra.mxu0 0
    %300 = vmatprep.subr.bf16.mxu0 0
    %301 = vmatpush1.bf16.msra.mxu0 0
    %302 = vmatprep.subr.bf16.mxu0 0
    %303 = vmatpush1.bf16.msra.mxu0 0
    %304 = vmatprep.subr.bf16.mxu0 0
    %305 = vmatpush1.bf16.msra.mxu0 0
    %306 = vmatprep.subr.bf16.mxu0 0
    %307 = vmatpush1.bf16.msra.mxu0 0
    %308 = vmatprep.subr.bf16.mxu0 0
    %309 = vmatpush1.bf16.msra.mxu0 0
    %310 = vmatprep.subr.bf16.mxu0 0
    %311 = vmatpush1.bf16.msra.mxu0 0
    %312 = vmatprep.subr.bf16.mxu0 0
    %313 = vmatpush1.bf16.msra.mxu0 0
    %314 = vmatprep.mubr.bf16.mxu0 0
    %315 = vmatmul.mubr.bf16.gmra.mrb[0].mxu0 %v229
    %v316 = vpop.f32.mrb[0].mxu0
    %v317 = vadd.f32 %v233, %v316
    %v318 = vpop.f32.mrb[0].mxu0
    %v319 = vpop.f32.mrb[0].mxu0
    %v320 = vpop.f32.mrb[0].mxu0
    %321 = vdwg.mxu0
    %322 = vxpose.xlu0.b32.start [1/16] %v317, 128
    %323 = vxpose.xlu0.b32.cont [2/16] 0.0, 128
    %324 = vxpose.xlu0.b32.cont [3/16] 0.0, 128
    %325 = vxpose.xlu0.b32.cont [4/16] 0.0, 128
    %326 = vxpose.xlu0.b32.cont [5/16] 0.0, 128
    %327 = vxpose.xlu0.b32.cont [6/16] 0.0, 128
    %328 = vxpose.xlu0.b32.cont [7/16] 0.0, 128
    %329 = vxpose.xlu0.b32.cont [8/16] 0.0, 128
    %330 = vxpose.xlu0.b32.cont [9/16] 0.0, 128
    %331 = vxpose.xlu0.b32.cont [10/16] 0.0, 128
    %332 = vxpose.xlu0.b32.cont [11/16] 0.0, 128
    %333 = vxpose.xlu0.b32.cont [12/16] 0.0, 128
    %334 = vxpose.xlu0.b32.cont [13/16] 0.0, 128
    %335 = vxpose.xlu0.b32.cont [14/16] 0.0, 128
    %336 = vxpose.xlu0.b32.cont [15/16] 0.0, 128
    %337 = vxpose.xlu0.b32.end [16/16] 0.0, 128
    %v338 = vpop.trf.xlu0
    %v339 = vpop.trf.xlu0
    %v340 = vpop.trf.xlu0
    %v341 = vpop.trf.xlu0
    %v342 = vpop.trf.xlu0
    %v343 = vpop.trf.xlu0
    %v344 = vpop.trf.xlu0
    %v345 = vpop.trf.xlu0
    %v346 = vpop.trf.xlu0
    %v347 = vpop.trf.xlu0
    %v348 = vpop.trf.xlu0
    %v349 = vpop.trf.xlu0
    %v350 = vpop.trf.xlu0
    %v351 = vpop.trf.xlu0
    %v352 = vpop.trf.xlu0
    %v353 = vpop.trf.xlu0
    %vm354 = vcmask 64512
    %355 = vst.msk [vmem:[#allocation7] sm:$0xff] %vm354, %v338
    // Predicated region
    $region18: #{tpu_custom_call.1} parent=1 // pred_check
      _
    $region19: #{tpu_custom_call.1} parent=1 // pred_check_branch
      %357 = sbr.rel (0) target = $region21
    $region20: #{tpu_custom_call.1} parent=1 // pred_region
      %s359 = ssub.s32 128, 128
      %360 = vsyncadd [#allocation4], %s359
      %s362 = sshll.u32 [#allocation7], 4
      %s363 = int_to_ptr.vmem [resolvable:$true] %s362
      %365 = dma.vmem_to_hbm [thread:$0]  %s363, 128, %s2, [#allocation4]
    $region21: #{tpu_custom_call.1} parent=1 // pred_fallthru
      _
    // Predicated region
    $region22: #{tpu_custom_call.1} parent=1 // pred_check
      _
    $region23: #{tpu_custom_call.1} parent=1 // pred_check_branch
      %367 = sbr.rel (0) target = $region25
    $region24: #{tpu_custom_call.1} parent=1 // pred_region
      %368 = dma.done [#allocation4], 128
    $region25: #{tpu_custom_call.1} parent=1 // pred_fallthru
      _
    %369 = vsyncpa [#allocation3], 1
    %370 = vsyncpa [#allocation6], 1
    %371 = vsyncpa [#allocation4], 1

</llo_original>
